<compile_context>
chip_gen: v7x
topology: tpu7x:2x2x1
jax: 0.10.0
libtpu: 0.0.40
codegen_flags: <defaults>
</compile_context>

<pallas_src>
from typing import NamedTuple

import jax
import jax.numpy as jnp
from jax.experimental import pallas as pl
from jax.experimental.pallas import tpu as pltpu


def _round_up(x, m):
    return ((x + m - 1) // m) * m


def _pick_tile(size, max_tile, align):
    """Return (tile, padded_size).

    If the whole dim fits one tile we use the full extent (exempt from the
    (8,128) divisibility rule) -> no padding.  Otherwise split into the fewest
    aligned tiles and pad up to a multiple of the tile.
    """
    if size <= max_tile:
        return size, size
    n_tiles = -(-size // max_tile)                     # cdiv
    tile = _round_up(-(-size // n_tiles), align)
    return tile, tile * n_tiles


class FusedParams(NamedTuple):
    w: jax.Array          # (Kp, Np) fused weight, matmul dtype, (D, L*C) layout
    b: jax.Array          # (1, Np) fused bias, float32
    n_labels: int
    n_classes: int
    d: int                # unpadded input size D
    tn: int               # N tile
    tk: int               # K tile


def prepare_params(weights, biases, *, matmul_dtype=jnp.bfloat16,
                   tn_max=2048, tk_max=1024, min_n_tiles=1):
    """One-time fusion of the per-label Linear parameters (hoisted off the
    per-call path).

    weights: (L, C, D) in PyTorch nn.Linear layout; biases: (L, C).
    Produces the lane-dense (D, L*C) RHS, cast to `matmul_dtype` and padded
    (only if needed) to the tiling used by the kernel.
    Set min_n_tiles=2 on v7x so both TensorCores get output tiles.
    """
    L, C, D = weights.shape
    N = L * C

    tk, Kp = _pick_tile(D, tk_max, 128)
    tn, Np = _pick_tile(N, tn_max, 128)
    # Keep >= min_n_tiles tiles along N (megacore sharding on v7x) when it
    # stays 128-aligned.
    if min_n_tiles > 1 and Np // tn < min_n_tiles and Np % (128 * min_n_tiles) == 0:
        tn = Np // min_n_tiles

    # Fuse labels: (L, C, D) -> (D, L*C). Column l*C + c is weights[l, c, :].
    w_fused = jnp.transpose(weights, (2, 0, 1)).reshape(D, N).astype(matmul_dtype)
    b_fused = biases.reshape(1, N).astype(jnp.float32)

    if (Kp, Np) != (D, N):      # pad once, at load time, only when required
        w_fused = jnp.zeros((Kp, Np), matmul_dtype).at[:D, :N].set(w_fused)
        b_fused = jnp.zeros((1, Np), jnp.float32).at[:, :N].set(b_fused)

    return FusedParams(w=w_fused, b=b_fused, n_labels=L, n_classes=C, d=D,
                       tn=tn, tk=tk)


def _fused_linear_single_k_kernel(x_ref, w_ref, b_ref, o_ref):
    # Whole contraction in one grid step; bias fused into the (lane-dense) store.
    o_ref[...] = (jnp.dot(x_ref[...], w_ref[...],
                          preferred_element_type=jnp.float32)
                  + b_ref[...]).astype(o_ref.dtype)


def _fused_linear_k_tiled_kernel(x_ref, w_ref, b_ref, o_ref):
    # Output tile is resident across the K ("arbitrary") axis: accumulate
    # directly into the f32 output ref -- no separate VMEM accumulator scratch.
    @pl.when(pl.program_id(2) == 0)
    def _init():
        o_ref[...] = jnp.broadcast_to(b_ref[...], o_ref.shape)   # bias added once

    o_ref[...] += jnp.dot(x_ref[...], w_ref[...],
                          preferred_element_type=jnp.float32)


def multi_label_classifier(x, params: FusedParams, *, tm_max=256):
    """x: (B, D) activations; params: output of prepare_params().

    Returns (B, L, C) float32, or (B, C) if L == 1 (matches the torch module).
    """
    B, D = x.shape
    assert D == params.d, (D, params.d)
    Kp, Np = params.w.shape
    N = params.n_labels * params.n_classes
    tn, tk = params.tn, params.tk

    tm, Mp = _pick_tile(B, tm_max, 8)

    x_mm = x.astype(params.w.dtype)
    if (Mp, Kp) != (B, D):       # only pad when genuinely misaligned
        x_mm = jnp.zeros((Mp, Kp), x_mm.dtype).at[:B, :D].set(x_mm)

    grid_m, grid_n, grid_k = Mp // tm, Np // tn, Kp // tk

    x_bytes = x_mm.dtype.itemsize
    w_bytes = params.w.dtype.itemsize
    # Double-buffered tile footprint + headroom, capped under v7x's 64 MiB VMEM.
    tile_bytes = 2 * (tm * tk * x_bytes + tk * tn * w_bytes + tn * 4
                      + tm * tn * 4)
    vmem_limit = int(min(max(2 * tile_bytes + (8 << 20), 32 << 20), 56 << 20))

    flops = 2 * Mp * Np * Kp
    bytes_accessed = (x_mm.size * x_bytes + params.w.size * w_bytes
                      + params.b.size * 4 + Mp * Np * 4)
    cost = pl.CostEstimate(flops=flops, transcendentals=0,
                           bytes_accessed=bytes_accessed)

    if grid_k == 1:
        # D fits one K tile: drop the K grid axis entirely.
        grid = (grid_m, grid_n)
        kernel = _fused_linear_single_k_kernel
        in_specs = [
            pl.BlockSpec((tm, tk), lambda i, j: (i, 0)),   # activations
            pl.BlockSpec((tk, tn), lambda i, j: (0, j)),   # fused weights
            pl.BlockSpec((1, tn), lambda i, j: (0, j)),    # fused bias row
        ]
        out_specs = pl.BlockSpec((tm, tn), lambda i, j: (i, j))
        dim_sem = ("parallel", "parallel")
    else:
        grid = (grid_m, grid_n, grid_k)
        kernel = _fused_linear_k_tiled_kernel
        in_specs = [
            pl.BlockSpec((tm, tk), lambda i, j, k: (i, k)),
            pl.BlockSpec((tk, tn), lambda i, j, k: (k, j)),
            pl.BlockSpec((1, tn), lambda i, j, k: (0, j)),
        ]
        out_specs = pl.BlockSpec((tm, tn), lambda i, j, k: (i, j))
        dim_sem = ("parallel", "parallel", "arbitrary")

    out = pl.pallas_call(
        kernel,
        out_shape=jax.ShapeDtypeStruct((Mp, Np), jnp.float32),
        grid_spec=pltpu.PrefetchScalarGridSpec(
            num_scalar_prefetch=0,
            grid=grid,
            in_specs=in_specs,
            out_specs=out_specs,
        ),
        compiler_params=pltpu.CompilerParams(
            dimension_semantics=dim_sem,
            vmem_limit_bytes=vmem_limit,
        ),
        cost_estimate=cost,
    )(x_mm, params.w, params.b)

    logits = out[:B, :N].reshape(B, params.n_labels, params.n_classes)
    if params.n_labels == 1:
        logits = logits[:, 0, :]        # matches .squeeze(1)
    return logits


if __name__ == "__main__":
    # Small shapes consistent with the module's forward.
    B = 8            # batch
    input_size = 32  # D
    n_classes = 16   # C
    n_labels = 3     # L

    key = jax.random.PRNGKey(0)
    kx, kw, kb = jax.random.split(key, 3)

    x = jax.random.normal(kx, (B, input_size), dtype=jnp.float32)
    weights = jax.random.normal(
        kw, (n_labels, n_classes, input_size), dtype=jnp.float32) * 0.1
    biases = jax.random.normal(kb, (n_labels, n_classes), dtype=jnp.float32) * 0.1

    # Reference = same math as the PyTorch module.
    ref = jnp.einsum("bd,lcd->blc", x, weights) + biases[None, :, :]

    # f32 matmul path: tight check (single-K kernel, no padding, full-extent blocks).
    params_f32 = prepare_params(weights, biases, matmul_dtype=jnp.float32)
    logits_f32 = jax.block_until_ready(multi_label_classifier(x, params_f32))
    assert logits_f32.shape == (B, n_labels, n_classes), logits_f32.shape
    assert jnp.allclose(logits_f32, ref, atol=1e-5, rtol=1e-5), "mismatch (f32)"

    # Default bf16 weight/activation stream (f32 accumulation): looser tolerance.
    params_bf16 = prepare_params(weights, biases)
    logits_bf16 = jax.block_until_ready(multi_label_classifier(x, params_bf16))
    assert logits_bf16.shape == (B, n_labels, n_classes), logits_bf16.shape
    assert jnp.allclose(logits_bf16, ref, atol=3e-2, rtol=3e-2), "mismatch (bf16)"

    # Force the K-tiled branch (tiny tk_max -> padded K, 2 K grid steps).
    params_kt = prepare_params(weights, biases, matmul_dtype=jnp.float32, tk_max=16)
    logits_kt = jax.block_until_ready(multi_label_classifier(x, params_kt))
    assert jnp.allclose(logits_kt, ref, atol=1e-5, rtol=1e-5), "mismatch (K-tiled)"

    # L == 1 exercises the .squeeze(1) branch of the PyTorch module.
    params_l1 = prepare_params(weights[:1], biases[:1], matmul_dtype=jnp.float32)
    logits1 = jax.block_until_ready(multi_label_classifier(x, params_l1))
    ref1 = x @ weights[0].T + biases[0]
    assert logits1.shape == (B, n_classes), logits1.shape
    assert jnp.allclose(logits1, ref1, atol=1e-5, rtol=1e-5), "mismatch (L==1)"

    print("KERNEL_OK")
</pallas_src>

<mosaic_0001>
module attributes {stable_mosaic.version = 11 : i64} {
  func.func @_fused_linear_single_k_kernel(%arg0: i32, %arg1: i32, %arg2: memref<8x32xf32, #tpu.memory_space<vmem>>, %arg3: memref<32x48xf32, #tpu.memory_space<vmem>>, %arg4: memref<1x48xf32, #tpu.memory_space<vmem>>, %arg5: memref<8x48xf32, #tpu.memory_space<vmem>>) attributes {dimension_semantics = [#tpu.dimension_semantics<parallel>, #tpu.dimension_semantics<parallel>], iteration_bounds = array<i64: 1, 1>, scalar_prefetch = 0 : i64, scratch_operands = 0 : i64, tpu.core_type = #tpu.core_type<tc>, window_params = [{transform_indices = @transform_0, window_bounds = array<i64: 8, 32>}, {transform_indices = @transform_1, window_bounds = array<i64: 32, 48>}, {transform_indices = @transform_2, window_bounds = array<i64: 1, 48>}, {transform_indices = @transform_3, window_bounds = array<i64: 8, 48>}]} {
    %c0 = arith.constant 0 : index
    %c0_0 = arith.constant 0 : index
    %0 = vector.load %arg2[%c0, %c0_0] : memref<8x32xf32, #tpu.memory_space<vmem>>, vector<8x32xf32>
    %c0_1 = arith.constant 0 : index
    %c0_2 = arith.constant 0 : index
    %1 = vector.load %arg3[%c0_1, %c0_2] : memref<32x48xf32, #tpu.memory_space<vmem>>, vector<32x48xf32>
    %cst = arith.constant dense<0.000000e+00> : vector<8x48xf32>
    %2 = tpu.matmul %0, %1, %cst {dimension_numbers = #tpu.dot_dimension_numbers<[1], [0], [0], [1], [0, 0, 1, 1], [], []>} : vector<8x32xf32>, vector<32x48xf32>, vector<8x48xf32> -> vector<8x48xf32>
    %c0_3 = arith.constant 0 : index
    %c0_4 = arith.constant 0 : index
    %3 = vector.load %arg4[%c0_3, %c0_4] : memref<1x48xf32, #tpu.memory_space<vmem>>, vector<1x48xf32>
    %4 = vector.broadcast %3 : vector<1x48xf32> to vector<8x48xf32>
    %5 = arith.addf %2, %4 : vector<8x48xf32>
    %c0_5 = arith.constant 0 : index
    %c0_6 = arith.constant 0 : index
    %6 = vector.load %arg5[%c0_5, %c0_6] : memref<8x48xf32, #tpu.memory_space<vmem>>, vector<8x48xf32>
    tpu.vector_store %arg5[%c0_5, %c0_6], %5 {strides = array<i32>} : memref<8x48xf32, #tpu.memory_space<vmem>>, vector<8x48xf32>,
    return
  }
  func.func @transform_0(%arg0: i32, %arg1: i32) -> (i32, i32) {
    %c0_i32 = arith.constant 0 : i32
    %c0_i32_0 = arith.constant 0 : i32
    return %arg0, %c0_i32 : i32, i32
  }
  func.func @transform_1(%arg0: i32, %arg1: i32) -> (i32, i32) {
    %c0_i32 = arith.constant 0 : i32
    %c0_i32_0 = arith.constant 0 : i32
    return %c0_i32, %arg1 : i32, i32
  }
  func.func @transform_2(%arg0: i32, %arg1: i32) -> (i32, i32) {
    %c0_i32 = arith.constant 0 : i32
    %c0_i32_0 = arith.constant 0 : i32
    return %c0_i32, %arg1 : i32, i32
  }
  func.func @transform_3(%arg0: i32, %arg1: i32) -> (i32, i32) {
    %c0_i32 = arith.constant 0 : i32
    return %arg0, %arg1 : i32, i32
  }
}

</mosaic_0001>

<llo_original>
// kernel: tpu_custom_call.1
$region0: #{tpu_custom_call.1}
  #allocation0 [shape = 'u32[]', space=smem, size = 0x4, offset = 0x4, fixed_abs, tag = 'smem constant byte address 0x4 - core index']
  #allocation1 [shape = 'u32[144,128]{1,0:T(1,128)}', space=vmem, size = 0x12000, scoped, tag = 'internal scratch']
  %s0 = inlined_call_operand.hbm [shape: f32[8,32], index: 0, kind: input, shape index: {}]
  %s1 = inlined_call_operand.hbm [shape: f32[32,48], index: 1, kind: input, shape index: {}]
  %s2 = inlined_call_operand.vmem [shape: f32[1,48], index: 2, kind: input, shape index: {}]
  %s3 = inlined_call_operand.hbm [shape: f32[8,48], index: 3, kind: output, shape index: {}]
  %s4 = sld [smem:[#allocation0]]
  $region30: #{tpu_custom_call.1} parent=0
    _
  %s6 = ssub.s32 1, %s4
  %s7 = scalar_select 0, %s6, %s4
  $region1: #{tpu_custom_call.1} parent=0
    #allocation2 [shape = 'u8[4096]{0}', space=vmem, size = 0x1000, scoped, tag = 'input window, operand 0, single buffered']
    #allocation3 [shape = 's32[1]{0}', space=sflag, size = 0x4, scoped, tag = 'scoped memory for tpu_custom_call.1']
    #allocation4 [shape = 's32[1]{0}', space=sflag, size = 0x4, scoped, tag = 'scoped memory for tpu_custom_call.1']
    #allocation5 [shape = 'u8[16384]{0}', space=vmem, size = 0x4000, scoped, tag = 'input window, operand 1, single buffered']
    #allocation6 [shape = 's32[1]{0}', space=sflag, size = 0x4, scoped, tag = 'scoped memory for tpu_custom_call.1']
    #allocation7 [shape = 'u8[4096]{0}', space=vmem, size = 0x1000, scoped, tag = 'output window, operand 0, single buffered']
    %8 = vsyncpa [#allocation3], 0
    %9 = vsyncpa [#allocation6], 0
    %10 = vsyncpa [#allocation4], 0
    // Predicated region
    $region2: #{tpu_custom_call.1} parent=1 // pred_check
      _
    $region3: #{tpu_custom_call.1} parent=1 // pred_check_branch
      %12 = sbr.rel (0) target = $region5
    $region4: #{tpu_custom_call.1} parent=1 // pred_region
      %s14 = ssub.s32 128, 128
      %15 = vsyncadd [#allocation3], %s14
      %s17 = sshll.u32 [#allocation2], 4
      %s18 = int_to_ptr.vmem [resolvable:$true] %s17
      %20 = dma.hbm_to_vmem [thread:$0]  %s0, 128, %s18, [#allocation3]
    $region5: #{tpu_custom_call.1} parent=1 // pred_fallthru
      _
    // Predicated region
    $region6: #{tpu_custom_call.1} parent=1 // pred_check
      _
    $region7: #{tpu_custom_call.1} parent=1 // pred_check_branch
      %22 = sbr.rel (0) target = $region9
    $region8: #{tpu_custom_call.1} parent=1 // pred_region
      %s24 = ssub.s32 512, 512
      %25 = vsyncadd [#allocation6], %s24
      %s26 = sshll.u32 [#allocation5], 4
      %s27 = int_to_ptr.vmem [resolvable:$true] %s26
      %32 = dma.hbm_to_vmem [thread:$0]  %s1, 512, %s27, [#allocation6], 128, 128, 8
    $region9: #{tpu_custom_call.1} parent=1 // pred_fallthru
      _
    // Predicated region
    $region10: #{tpu_custom_call.1} parent=1 // pred_check
      _
    $region11: #{tpu_custom_call.1} parent=1 // pred_check_branch
      %34 = sbr.rel (0) target = $region13
    $region12: #{tpu_custom_call.1} parent=1 // pred_region
      _
    $region13: #{tpu_custom_call.1} parent=1 // pred_fallthru
      _
    // Predicated region
    $region14: #{tpu_custom_call.1} parent=1 // pred_check
      _
    $region15: #{tpu_custom_call.1} parent=1 // pred_check_branch
      %36 = sbr.rel (0) target = $region17
    $region16: #{tpu_custom_call.1} parent=1 // pred_region
      %37 = dma.done [#allocation3], 128
    $region17: #{tpu_custom_call.1} parent=1 // pred_fallthru
      _
    // Predicated region
    $region18: #{tpu_custom_call.1} parent=1 // pred_check
      _
    $region19: #{tpu_custom_call.1} parent=1 // pred_check_branch
      %39 = sbr.rel (0) target = $region21
    $region20: #{tpu_custom_call.1} parent=1 // pred_region
      %40 = dma.done [#allocation6], 512
    $region21: #{tpu_custom_call.1} parent=1 // pred_fallthru
      _
    %v41 = vld [vmem:[#allocation2] sm:$0xff]
    %v42 = vld [vmem:[#allocation5] sm:$0xff]
    %v43 = vld [vmem:[#allocation5 + $0x8] sm:$0xff]
    %v44 = vld [vmem:[#allocation5 + $0x10] sm:$0xff]
    %v45 = vld [vmem:[#allocation5 + $0x18] sm:$0xff]
    %v46 = vld [vmem:[%s2] sm:$0x1]
    %v48 = vlaneseq
    %v49 = vshrl.u32 %v48, 7
    %v50 = vsub.s32 0, %v49
    %v51 = vrot.slane %v46, %v50
    %vm53 = vcmask 261120
    %v55 = vsel %vm53, %v41, 0
    %57 = vmatprep.subr.mxu0 0.0
    %58 = vmatpush1.msra.mxu0 %v42
    %59 = vmatprep.subr.mxu0 0.0
    %60 = vmatpush1.msra.mxu0 %v43
    %61 = vmatprep.subr.mxu0 0.0
    %62 = vmatpush1.msra.mxu0 %v44
    %63 = vmatprep.subr.mxu0 0.0
    %64 = vmatpush1.msra.mxu0 %v45
    %65 = vmatprep.subr.mxu0 0.0
    %66 = vmatpush1.msra.mxu0 0.0
    %67 = vmatprep.subr.mxu0 0.0
    %68 = vmatpush1.msra.mxu0 0.0
    %69 = vmatprep.subr.mxu0 0.0
    %70 = vmatpush1.msra.mxu0 0.0
    %71 = vmatprep.subr.mxu0 0.0
    %72 = vmatpush1.msra.mxu0 0.0
    %73 = vmatprep.subr.mxu0 0.0
    %74 = vmatpush1.msra.mxu0 0.0
    %75 = vmatprep.subr.mxu0 0.0
    %76 = vmatpush1.msra.mxu0 0.0
    %77 = vmatprep.subr.mxu0 0.0
    %78 = vmatpush1.msra.mxu0 0.0
    %79 = vmatprep.subr.mxu0 0.0
    %80 = vmatpush1.msra.mxu0 0.0
    %81 = vmatprep.subr.mxu0 0.0
    %82 = vmatpush1.msra.mxu0 0.0
    %83 = vmatprep.subr.mxu0 0.0
    %84 = vmatpush1.msra.mxu0 0.0
    %85 = vmatprep.subr.mxu0 0.0
    %86 = vmatpush1.msra.mxu0 0.0
    %87 = vmatprep.subr.mxu0 0.0
    %88 = vmatpush1.msra.mxu0 0.0
    %89 = vmatprep.subr.mxu0 0.0
    %90 = vmatpush1.msra.mxu0 0.0
    %91 = vmatprep.subr.mxu0 0.0
    %92 = vmatpush1.msra.mxu0 0.0
    %93 = vmatprep.subr.mxu0 0.0
    %94 = vmatpush1.msra.mxu0 0.0
    %95 = vmatprep.subr.mxu0 0.0
    %96 = vmatpush1.msra.mxu0 0.0
    %97 = vmatprep.subr.mxu0 0.0
    %98 = vmatpush1.msra.mxu0 0.0
    %99 = vmatprep.subr.mxu0 0.0
    %100 = vmatpush1.msra.mxu0 0.0
    %101 = vmatprep.subr.mxu0 0.0
    %102 = vmatpush1.msra.mxu0 0.0
    %103 = vmatprep.subr.mxu0 0.0
    %104 = vmatpush1.msra.mxu0 0.0
    %105 = vmatprep.subr.mxu0 0.0
    %106 = vmatpush1.msra.mxu0 0.0
    %107 = vmatprep.subr.mxu0 0.0
    %108 = vmatpush1.msra.mxu0 0.0
    %109 = vmatprep.subr.mxu0 0.0
    %110 = vmatpush1.msra.mxu0 0.0
    %111 = vmatprep.subr.mxu0 0.0
    %112 = vmatpush1.msra.mxu0 0.0
    %113 = vmatprep.subr.mxu0 0.0
    %114 = vmatpush1.msra.mxu0 0.0
    %115 = vmatprep.subr.mxu0 0.0
    %116 = vmatpush1.msra.mxu0 0.0
    %117 = vmatprep.subr.mxu0 0.0
    %118 = vmatpush1.msra.mxu0 0.0
    %119 = vmatprep.subr.mxu0 0.0
    %120 = vmatpush1.msra.mxu0 0.0
    %121 = vmatprep.mubr.f32.mxu0 0.0
    %122 = vmatmul.mubr.f32.gmra.mrb[0].mxu0 %v55
    %v123 = vpop.f32.mrb[0].mxu0
    %v124 = vadd.f32 %v51, %v123
    %v125 = vpop.f32.mrb[0].mxu0
    %126 = vdwg.mxu0
    %vm127 = vcmask 392192
    %128 = vst.msk [vmem:[#allocation7] sm:$0xff] %vm127, %v124
    // Predicated region
    $region22: #{tpu_custom_call.1} parent=1 // pred_check
      _
    $region23: #{tpu_custom_call.1} parent=1 // pred_check_branch
      %130 = sbr.rel (0) target = $region25
    $region24: #{tpu_custom_call.1} parent=1 // pred_region
      %s132 = ssub.s32 128, 128
      %133 = vsyncadd [#allocation4], %s132
      %s135 = sshll.u32 [#allocation7], 4
      %s136 = int_to_ptr.vmem [resolvable:$true] %s135
      %138 = dma.vmem_to_hbm [thread:$0]  %s136, 128, %s3, [#allocation4]
    $region25: #{tpu_custom_call.1} parent=1 // pred_fallthru
      _
    // Predicated region
    $region26: #{tpu_custom_call.1} parent=1 // pred_check
      _
    $region27: #{tpu_custom_call.1} parent=1 // pred_check_branch
      %140 = sbr.rel (0) target = $region29
    $region28: #{tpu_custom_call.1} parent=1 // pred_region
      %141 = dma.done [#allocation4], 128
    $region29: #{tpu_custom_call.1} parent=1 // pred_fallthru
      _
    %142 = vsyncpa [#allocation3], 1
    %143 = vsyncpa [#allocation6], 1
    %144 = vsyncpa [#allocation4], 1

</llo_original>
